<compile_context>
chip_gen: v7x
topology: tpu7x:2x2x1
jax: 0.10.0
libtpu: 0.0.40
codegen_flags: <defaults>
</compile_context>

<pallas_src>
import jax
import jax.numpy as jnp
from jax.experimental import pallas as pl
from jax.experimental.pallas import tpu as pltpu

H_LSTM = 200        # LSTM hidden size
H_PAD = 256         # padded per-gate width (128-lane aligned)
WP = 128            # padded image row width (exactly one lane group)

# (dy, dx) offsets of a 3x3 / pad-1 conv in the flat (C, B*(H+2)*WP) layout.
_OFFS = tuple(dy * WP + dx for dy in (-1, 0, 1) for dx in (-1, 0, 1))

_ROLL_MATCHES_JNP = True   # set by _probe_roll_convention() at param-prep time


# ------------------------- roll convention probe ----------------------------

def _probe_roll_convention():
    """Probe pltpu.roll's shift direction once (eagerly, outside jit) so the
    shifted-view convs move data the right way on every backend."""
    global _ROLL_MATCHES_JNP

    def k(x_ref, o_ref):
        o_ref[...] = pltpu.roll(x_ref[...], 1, 1)

    x = jax.lax.broadcasted_iota(jnp.float32, (8, 256), 1)
    y = pl.pallas_call(k, out_shape=jax.ShapeDtypeStruct((8, 256), jnp.float32))(x)
    # jnp.roll convention: out[i] = x[i - 1]  =>  out[:, 1] == 0
    _ROLL_MATCHES_JNP = bool(abs(float(y[0, 1])) < 0.5)


def _shifted(x, off):
    """Return s with s[:, g] == x[:, (g + off) mod L]; wrap garbage only ever
    lands in masked padding cells."""
    if off == 0:
        return x
    L = x.shape[-1]
    amt = (-off if _ROLL_MATCHES_JNP else off) % L
    return pltpu.roll(x, amt, 1)


# ------------------------- Pallas kernels ----------------------------------

def _stage_kernel(has_extra):
    """One UNet resolution stage: two 3x3/pad-1 convs (+ReLU) on a flat
    (C, B*(H+2)*WP) layout, conv = 9 shifted matmuls; optional fused trailing
    matmul (1x1 conv or non-overlapping ConvTranspose expressed as a matmul)."""
    def kernel(*refs):
        if has_extra:
            (x_ref, w1_ref, b1_ref, w2_ref, b2_ref, we_ref, be_ref, mask_ref,
             y_ref, e_ref) = refs
        else:
            (x_ref, w1_ref, b1_ref, w2_ref, b2_ref, mask_ref, y_ref) = refs

        mask = mask_ref[...]                                  # (1, L) f32
        x = x_ref[...].astype(jnp.float32)                    # (Cin, L)

        def conv3x3(xin, w_ref, b_ref):
            acc = None
            for p, off in enumerate(_OFFS):
                xs = _shifted(xin, off)
                w = w_ref[p]                                  # (Co, Ci) bf16
                if w.shape[1] == 1:                           # Ci == 1: VPU bcast
                    t = w.astype(jnp.float32) * xs
                else:
                    t = jnp.dot(w, xs.astype(jnp.bfloat16),
                                preferred_element_type=jnp.float32)
                acc = t if acc is None else acc + t
            return acc + b_ref[...]

        h = jnp.maximum(conv3x3(x, w1_ref, b1_ref), 0.0) * mask
        y = jnp.maximum(conv3x3(h, w2_ref, b2_ref), 0.0) * mask
        y_ref[...] = y
        if has_extra:
            e_ref[...] = (jnp.dot(we_ref[...], y.astype(jnp.bfloat16),
                                  preferred_element_type=jnp.float32)
                          + be_ref[...])
    return kernel


def _convpool_kernel(pool_op, n_phase):
    """Strided conv as lane-dense im2col matmul, bias+ReLU fused, pooled over
    the phase axis in-epilogue (min for -maxpool(-x), avg for AvgPool)."""
    def kernel(w_ref, b_ref, p_ref, o_ref):
        w = w_ref[...]                       # (Co, Ci*K*K) bf16
        b = b_ref[...]                       # (Co, 1) f32

        def mm(xt):
            return jnp.maximum(
                jnp.dot(w, xt, preferred_element_type=jnp.float32) + b, 0.0)

        r = mm(p_ref[0])
        for ph in range(1, n_phase):
            v = mm(p_ref[ph])
            if pool_op == "min":
                r = jnp.minimum(r, v)
            elif pool_op == "max":
                r = jnp.maximum(r, v)
            else:
                r = r + v
        if pool_op == "avg":
            r = r * (1.0 / n_phase)
        o_ref[...] = r
    return kernel


def _lstm_fc_kernel(L, Hp, H):
    """2-layer bias-free LSTM (gates padded to Hp=256, layer-1 matmuls merged)
    + spectral-normalized FC head.  Layer-0 input projection done in XLA."""
    def kernel(gx0_ref, whh0_ref, w1_ref,
               fc1w_ref, fc1b_ref, fc2w_ref, fc2b_ref, fc3w_ref, fc3b_ref,
               y_ref, hn_ref, cn_ref, ybuf):
        gx0 = gx0_ref[...]                    # (L, 4*Hp) f32
        whh0 = whh0_ref[...]                  # (Hp, 4*Hp) bf16
        w1 = w1_ref[...]                      # (2*Hp, 4*Hp) bf16

        def gates(g, c):                      # 128-aligned gate slices
            i_g = jax.nn.sigmoid(g[:, 0:Hp])
            f_g = jax.nn.sigmoid(g[:, Hp:2 * Hp])
            g_g = jnp.tanh(g[:, 2 * Hp:3 * Hp])
            o_g = jax.nn.sigmoid(g[:, 3 * Hp:4 * Hp])
            c_n = f_g * c + i_g * g_g
            return o_g * jnp.tanh(c_n), c_n

        h0 = jnp.zeros((1, Hp), jnp.float32)
        c0 = jnp.zeros((1, Hp), jnp.float32)
        h1 = jnp.zeros((1, Hp), jnp.float32)
        c1 = jnp.zeros((1, Hp), jnp.float32)
        # TODO(synk): switch to lax.fori_loop with pl.ds-indexed ybuf once the
        # sequence length grows beyond a handful (here L == batch == 2).
        for t in range(L):
            g0 = gx0[t:t + 1, :] + jnp.dot(h0.astype(whh0.dtype), whh0,
                                           preferred_element_type=jnp.float32)
            h0, c0 = gates(g0, c0)
            # inter-layer dropout (p=0.15) disabled: eval semantics
            hcat = jnp.concatenate([h0, h1], axis=1)          # (1, 2*Hp)
            g1 = jnp.dot(hcat.astype(w1.dtype), w1,
                         preferred_element_type=jnp.float32)
            h1, c1 = gates(g1, c1)
            ybuf[t:t + 1, :] = h1

        hn_ref[0:1, :] = h0[:, :H]
        hn_ref[1:2, :] = h1[:, :H]
        cn_ref[0:1, :] = c0[:, :H]
        cn_ref[1:2, :] = c1[:, :H]

        y = ybuf[...]                                          # (L, Hp)
        z = jnp.dot(y, fc1w_ref[...], preferred_element_type=jnp.float32) + fc1b_ref[...]
        z = jnp.where(z > 0.0, z, 0.01 * z)
        z = jnp.dot(z, fc2w_ref[...], preferred_element_type=jnp.float32) + fc2b_ref[...]
        z = jnp.where(z > 0.0, z, 0.01 * z)
        z = jnp.dot(z, fc3w_ref[...], preferred_element_type=jnp.float32) + fc3b_ref[...]
        y_ref[...] = z
    return kernel


# ------------------------- pallas_call wrappers ------------------------------

def _full_specs(arrays):
    specs = []
    for a in arrays:
        nd = a.ndim
        specs.append(pl.BlockSpec(tuple(a.shape), lambda i, _nd=nd: (0,) * _nd))
    return specs


def unet_stage(x_flat, mask_flat, w1, b1, w2, b2, we=None, be=None):
    """x_flat: (Cin, L) bf16.  Returns (y2 (Co2, L) f32[, extra (Ce, L) f32])."""
    _, L = x_flat.shape
    co2 = w2.shape[1]
    has_extra = we is not None
    args = [x_flat, w1, b1, w2, b2]
    if has_extra:
        args += [we, be]
    args.append(mask_flat)

    out_shapes = [jax.ShapeDtypeStruct((co2, L), jnp.float32)]
    out_specs = [pl.BlockSpec((co2, L), lambda i: (0, 0))]
    if has_extra:
        ce = we.shape[0]
        out_shapes.append(jax.ShapeDtypeStruct((ce, L), jnp.float32))
        out_specs.append(pl.BlockSpec((ce, L), lambda i: (0, 0)))

    return pl.pallas_call(
        _stage_kernel(has_extra),
        out_shape=tuple(out_shapes),
        grid=(1,),
        in_specs=_full_specs(args),
        out_specs=tuple(out_specs),
    )(*args)


def conv2d_pool(x, wm, bm, K, stride, pool_k, pool_op):
    """Valid conv (stride>1) + ReLU + stride-1 pool_k x pool_k pooling fused in
    one pallas_call via per-phase im2col patch stacks (small tensors only)."""
    B, Ci, H, W = x.shape
    Hc = (H - K) // stride + 1
    Wc = (W - K) // stride + 1
    Hop = Hc - pool_k + 1
    Wop = Wc - pool_k + 1
    phases = [_im2col(x, K, stride, Hop, Wop, oy=dy * stride, ox=dx * stride)
              for dy in range(pool_k) for dx in range(pool_k)]
    pp = jnp.stack(phases, 0).astype(jnp.bfloat16)     # (P, Ci*K*K, B*Hop*Wop)
    n_phase, _, m = pp.shape
    co = wm.shape[0]
    args = [wm, bm, pp]
    y = pl.pallas_call(
        _convpool_kernel(pool_op, n_phase),
        out_shape=jax.ShapeDtypeStruct((co, m), jnp.float32),
        grid=(1,),
        in_specs=_full_specs(args),
        out_specs=pl.BlockSpec((co, m), lambda i: (0, 0)),
    )(*args)
    return y.reshape(co, B, Hop, Wop).transpose(1, 0, 2, 3)


def lstm_fc_forward(gx0, q):
    """gx0: (L, 4*Hp) = x_lstm @ W_ih0 (done in XLA).  Returns (y, h_n, c_n)."""
    L = gx0.shape[0]
    H, Hp = H_LSTM, H_PAD
    args = [gx0, q["lstm_whh0"], q["lstm_w1"],
            q["fc1_w"], q["fc1_b"], q["fc2_w"], q["fc2_b"], q["fc3_w"], q["fc3_b"]]
    y, hn, cn = pl.pallas_call(
        _lstm_fc_kernel(L, Hp, H),
        out_shape=(jax.ShapeDtypeStruct((L, 3), jnp.float32),
                   jax.ShapeDtypeStruct((2, H), jnp.float32),
                   jax.ShapeDtypeStruct((2, H), jnp.float32)),
        grid=(1,),
        in_specs=_full_specs(args),
        out_specs=(pl.BlockSpec((L, 3), lambda i: (0, 0)),
                   pl.BlockSpec((2, H), lambda i: (0, 0)),
                   pl.BlockSpec((2, H), lambda i: (0, 0))),
        scratch_shapes=[pltpu.VMEM((L, Hp), jnp.float32)],
    )(*args)
    return y, hn, cn


# ------------------------- XLA layout glue (tiny tensors) --------------------

def pad_flatten(x_nchw, dtype=jnp.bfloat16):
    """(B, C, H, W) -> (C, B*(H+2)*WP); valid data at rows 1..H, cols 1..W."""
    B, C, H, W = x_nchw.shape
    xp = jnp.pad(x_nchw, ((0, 0), (0, 0), (1, 1), (1, WP - W - 1)))
    return xp.transpose(1, 0, 2, 3).reshape(C, B * (H + 2) * WP).astype(dtype)


def unflatten(y_flat, B, H, W):
    """(C, B*(H+2)*WP) -> (B, C, H, W)."""
    C = y_flat.shape[0]
    y = y_flat.reshape(C, B, H + 2, WP)[:, :, 1:H + 1, 1:W + 1]
    return y.transpose(1, 0, 2, 3)


def flat_mask(B, H, W):
    return pad_flatten(jnp.ones((B, 1, H, W), jnp.float32), dtype=jnp.float32)


def maxpool_xla(x, k, stride):
    B, C, H, W = x.shape
    Ho = (H - k) // stride + 1
    Wo = (W - k) // stride + 1
    r = None
    for dy in range(k):
        for dx in range(k):
            v = x[:, :, dy:dy + (Ho - 1) * stride + 1:stride,
                        dx:dx + (Wo - 1) * stride + 1:stride]
            r = v if r is None else jnp.maximum(r, v)
    return r


def upsample_scatter(e_flat, B, Hi, Wi, Co, K):
    """Scatter the fused ConvTranspose matmul output (Co*K*K, L_in) to NCHW."""
    rows = e_flat.shape[0]
    e = e_flat.reshape(rows, B, Hi + 2, WP)[:, :, 1:Hi + 1, 1:Wi + 1]
    e = e.reshape(Co, K, K, B, Hi, Wi).transpose(3, 0, 4, 1, 5, 2)
    return e.reshape(B, Co, Hi * K, Wi * K)


def _im2col(xp, K, stride, Ho, Wo, oy=0, ox=0):
    """(B,Ci,H,W) -> (Ci*K*K, B*Ho*Wo); column index = b*Ho*Wo + ho*Wo + wo."""
    cols = []
    for kh in range(K):
        for kw in range(K):
            cols.append(xp[:, :, oy + kh:oy + kh + (Ho - 1) * stride + 1:stride,
                               ox + kw:ox + kw + (Wo - 1) * stride + 1:stride])
    p = jnp.stack(cols, axis=2)                       # (B, Ci, K*K, Ho, Wo)
    Ci = xp.shape[1]
    return p.transpose(1, 2, 0, 3, 4).reshape(Ci * K * K, -1)


def spectral_normalize(w, iters=30):
    """W / sigma_max(W) via power iteration (param prep, run once).
    TODO(synk): PyTorch eval uses the buffered u/v from training; sigma may
    differ slightly from this deterministic estimate."""
    u = jnp.ones((w.shape[0],), jnp.float32) / jnp.sqrt(float(w.shape[0]))
    v = None
    for _ in range(iters):
        v = w.T @ u
        v = v / (jnp.linalg.norm(v) + 1e-12)
        u = w @ v
        u = u / (jnp.linalg.norm(u) + 1e-12)
    sigma = u @ (w @ v)
    return w / sigma


# ------------------------- parameters ---------------------------------------

def init_params(key):
    keys = iter(jax.random.split(key, 64))

    def W(shape, scale=0.05):
        return scale * jax.random.normal(next(keys), shape, jnp.float32)

    p = {}
    conv_defs = {
        "e11": (4, 1, 3, 3), "e12": (4, 4, 3, 3),
        "e21": (8, 4, 3, 3), "e22": (8, 8, 3, 3),
        "e31": (16, 8, 3, 3), "e32": (16, 16, 3, 3),
        "d11": (8, 16, 3, 3), "d12": (8, 8, 3, 3),
        "d21": (4, 8, 3, 3), "d22": (4, 4, 3, 3),
        "out": (1, 4, 1, 1),
        "conv1": (4, 2, 5, 5), "conv2": (10, 4, 5, 5),
    }
    for name, shp in conv_defs.items():
        p[name + "_w"] = W(shp)
        p[name + "_b"] = W((shp[0],), 0.02)
    p["up1_w"] = W((16, 8, 2, 2)); p["up1_b"] = W((8,), 0.02)
    p["up2_w"] = W((8, 4, 3, 3)); p["up2_b"] = W((4,), 0.02)
    p["bn_gamma"] = 1.0 + W((4,), 0.02); p["bn_beta"] = W((4,), 0.02)
    p["bn_mean"] = jnp.zeros((4,), jnp.float32)
    p["bn_var"] = jnp.ones((4,), jnp.float32)
    p["lstm_wih0"] = W((800, 3065), 0.02); p["lstm_whh0"] = W((800, 200), 0.02)
    p["lstm_wih1"] = W((800, 200), 0.02);  p["lstm_whh1"] = W((800, 200), 0.02)
    p["fc1_w"] = W((64, 200)); p["fc1_b"] = W((64,), 0.02)
    p["fc2_w"] = W((32, 64));  p["fc2_b"] = W((32,), 0.02)
    p["fc3_w"] = W((3, 32));   p["fc3_b"] = W((3,), 0.02)
    return p


def prepare_params(p):
    """One-time parameter prep (run eagerly, NOT inside the per-forward jit):
    3x3 weights stacked per phase (9, Co, Ci) bf16, BatchNorm folded into
    conv_conv1, ConvTranspose reshaped to matmul form, spectral norm applied,
    LSTM weights transposed / gate-padded to 256 / layer-1 weights merged."""
    _probe_roll_convention()
    f32, bf16 = jnp.float32, jnp.bfloat16
    q = {}

    def stack9(w):                 # (Co, Ci, 3, 3) -> (9, Co, Ci), p = ky*3+kx
        return w.transpose(2, 3, 0, 1).reshape(9, w.shape[0], w.shape[1]).astype(bf16)

    for name in ("e11", "e12", "e21", "e22", "e31", "e32",
                 "d11", "d12", "d21", "d22"):
        q[name + "_w9"] = stack9(p[name + "_w"])
        q[name + "_b"] = p[name + "_b"].reshape(-1, 1).astype(f32)

    # 1x1 unet_out conv (fused into the D2 stage epilogue).
    q["out_w"] = p["out_w"].reshape(1, 4).astype(bf16)
    q["out_b"] = p["out_b"].reshape(1, 1).astype(f32)

    # Non-overlapping ConvTranspose (kernel == stride) as a plain matmul,
    # fused into the producing stage; XLA does the tiny pixel scatter.
    for name, K in (("up1", 2), ("up2", 3)):
        w = p[name + "_w"]                                     # (Ci, Co, K, K)
        q[name + "_w"] = w.reshape(w.shape[0], -1).T.astype(bf16)   # (Co*K*K, Ci)
        q[name + "_b"] = jnp.repeat(p[name + "_b"], K * K).reshape(-1, 1).astype(f32)

    # Conv branch: fold BatchNorm (eval running stats) into conv_conv1.
    s = p["bn_gamma"] / jnp.sqrt(p["bn_var"] + 1e-5)
    t = p["bn_beta"] - p["bn_mean"] * s
    q["conv1_wm"] = (p["conv1_w"] * s[:, None, None, None]).reshape(4, -1).astype(bf16)
    q["conv1_bm"] = (p["conv1_b"] * s + t).reshape(-1, 1).astype(f32)
    q["conv2_wm"] = p["conv2_w"].reshape(10, -1).astype(bf16)
    q["conv2_bm"] = p["conv2_b"].reshape(-1, 1).astype(f32)

    # LSTM: transpose to (in, 4*H), pad each gate 200 -> 256 (128-aligned),
    # bf16 storage, merge layer-1 input+recurrent weights.
    H, Hp = H_LSTM, H_PAD

    def pack(w, in_dim, pad_rows):
        rows = Hp if pad_rows else in_dim
        out = jnp.zeros((rows, 4 * Hp), f32)
        for g in range(4):
            out = out.at[:in_dim, g * Hp:g * Hp + H].set(w[g * H:(g + 1) * H, :].T)
        return out.astype(bf16)

    q["lstm_wih0"] = pack(p["lstm_wih0"], 3065, False)          # (3065, 4*Hp)
    q["lstm_whh0"] = pack(p["lstm_whh0"], H, True)              # (Hp, 4*Hp)
    q["lstm_w1"] = jnp.concatenate([pack(p["lstm_wih1"], H, True),
                                    pack(p["lstm_whh1"], H, True)], axis=0)

    fc1 = spectral_normalize(p["fc1_w"].astype(f32))
    fc2 = spectral_normalize(p["fc2_w"].astype(f32))
    fc3 = spectral_normalize(p["fc3_w"].astype(f32))
    q["fc1_w"] = jnp.zeros((Hp, fc1.shape[0]), f32).at[:H, :].set(fc1.T)
    q["fc2_w"] = fc2.T
    q["fc3_w"] = fc3.T
    q["fc1_b"] = p["fc1_b"].reshape(1, -1).astype(f32)
    q["fc2_b"] = p["fc2_b"].reshape(1, -1).astype(f32)
    q["fc3_b"] = p["fc3_b"].reshape(1, -1).astype(f32)
    return q


# ------------------------- model forward ------------------------------------

def _forward_core(img, des_vel, quat, q):
    B = img.shape[0]
    f32 = jnp.float32
    img = img.astype(f32)

    mask60 = flat_mask(B, 60, 90)
    mask20 = flat_mask(B, 20, 30)
    mask10 = flat_mask(B, 10, 15)

    # ---- UNet encoder (one pallas_call per resolution stage) ----
    (y_e1_f,) = unet_stage(pad_flatten(img), mask60,
                           q["e11_w9"], q["e11_b"], q["e12_w9"], q["e12_b"])
    y_e1 = unflatten(y_e1_f, B, 60, 90)                          # (B,4,60,90)

    enc1 = maxpool_xla(y_e1, 2, 3)                               # (B,4,20,30)
    (y_e2_f,) = unet_stage(pad_flatten(enc1), mask20,
                           q["e21_w9"], q["e21_b"], q["e22_w9"], q["e22_b"])
    y_e2 = unflatten(y_e2_f, B, 20, 30)                          # (B,8,20,30)

    enc2 = maxpool_xla(y_e2, 2, 2)                               # (B,8,10,15)
    y_e3_f, up1_f = unet_stage(pad_flatten(enc2), mask10,
                               q["e31_w9"], q["e31_b"], q["e32_w9"], q["e32_b"],
                               we=q["up1_w"], be=q["up1_b"])
    y_e3 = unflatten(y_e3_f, B, 10, 15)                          # (B,16,10,15)
    up1 = upsample_scatter(up1_f, B, 10, 15, Co=8, K=2)          # (B,8,20,30)

    # ---- UNet decoder ----
    d1_in = jnp.concatenate([up1, y_e2], axis=1)                 # (B,16,20,30)
    _, up2_f = unet_stage(pad_flatten(d1_in), mask20,
                          q["d11_w9"], q["d11_b"], q["d12_w9"], q["d12_b"],
                          we=q["up2_w"], be=q["up2_b"])
    up2 = upsample_scatter(up2_f, B, 20, 30, Co=4, K=3)          # (B,4,60,90)

    d2_in = jnp.concatenate([up2, y_e1], axis=1)                 # (B,8,60,90)
    _, y_unet_f = unet_stage(pad_flatten(d2_in), mask60,
                             q["d21_w9"], q["d21_b"], q["d22_w9"], q["d22_b"],
                             we=q["out_w"], be=q["out_b"])
    y_unet = unflatten(y_unet_f, B, 60, 90)                      # (B,1,60,90)

    # ---- conv branch (BN folded; min/avg pools fused into the conv kernels) ----
    x_conv = jnp.concatenate([img, y_unet], axis=1)              # (B,2,60,90)
    y = conv2d_pool(x_conv, q["conv1_wm"], q["conv1_bm"],
                    K=5, stride=3, pool_k=2, pool_op="min")      # (B,4,18,28)
    y_conv = conv2d_pool(y, q["conv2_wm"], q["conv2_bm"],
                         K=5, stride=2, pool_k=2, pool_op="avg") # (B,10,6,11)

    # ---- LSTM + spectral-normalized FC head ----
    # 2D input => PyTorch treats it as an unbatched sequence of length B.
    x_lstm = jnp.concatenate([y_conv.reshape(B, -1),
                              y_e3.reshape(B, -1),
                              des_vel.astype(f32) * 0.1,
                              quat.astype(f32)], axis=1)         # (B,3065)
    gx0 = jnp.dot(x_lstm.astype(jnp.bfloat16), q["lstm_wih0"],
                  preferred_element_type=f32)                    # layer-0 proj (XLA)
    y_out, h_n, c_n = lstm_fc_forward(gx0, q)
    return y_out, (h_n, c_n)


_forward_core_jit = jax.jit(_forward_core)


def forward(X, params):
    """X = [img(NCHW), des_vel(B,1), quat(B,4) or None].  params = prepare_params(...)"""
    img, des_vel, quat = X[0], X[1], X[2]
    B = img.shape[0]
    if quat is None:
        quat = jnp.zeros((B, 4), jnp.float32).at[:, 0].set(1.0)
    if img.shape[-2] != 60 or img.shape[-1] != 90:
        # TODO(synk): jax.image.resize bilinear differs slightly from
        # F.interpolate(mode='bilinear', antialias=False) on downscale.
        img = jax.image.resize(img, (B, img.shape[1], 60, 90), method="bilinear")
    # TODO(synk): optional caller-provided initial LSTM state (X[3]) not supported.
    return _forward_core_jit(img, des_vel, quat, params)


# ------------------------- demo ---------------------------------------------

if __name__ == "__main__":
    B = 2
    key = jax.random.PRNGKey(0)
    k_img, k_vel = jax.random.split(key)
    img = jax.random.uniform(k_img, (B, 1, 60, 90), jnp.float32)
    des_vel = jax.random.normal(k_vel, (B, 1), jnp.float32)
    quat = None

    params = prepare_params(init_params(jax.random.PRNGKey(42)))
    y, (h_n, c_n) = forward([img, des_vel, quat], params)
    jax.block_until_ready((y, h_n, c_n))

    assert y.shape == (B, 3)
    assert h_n.shape == (2, 200) and c_n.shape == (2, 200)
    assert bool(jnp.all(jnp.isfinite(y)))
    assert bool(jnp.all(jnp.isfinite(h_n))) and bool(jnp.all(jnp.isfinite(c_n)))
    print("KERNEL_OK")
</pallas_src>

<mosaic_0001>
module attributes {stable_mosaic.version = 11 : i64} {
  func.func @k(%arg0: memref<8x256xf32, #tpu.memory_space<vmem>>, %arg1: memref<8x256xf32, #tpu.memory_space<vmem>>) attributes {dimension_semantics = [], scalar_prefetch = 0 : i64, scratch_operands = 0 : i64, tpu.core_type = #tpu.core_type<tc>} {
    %c0 = arith.constant 0 : index
    %c0_0 = arith.constant 0 : index
    %0 = vector.load %arg0[%c0, %c0_0] : memref<8x256xf32, #tpu.memory_space<vmem>>, vector<8x256xf32>
    %c1_i32 = arith.constant 1 : i32
    %1 = tpu.dynamic_rotate %0 by %c1_i32 dim 1 : vector<8x256xf32>, i32 -> vector<8x256xf32>
    %c0_1 = arith.constant 0 : index
    %c0_2 = arith.constant 0 : index
    %2 = vector.load %arg1[%c0_1, %c0_2] : memref<8x256xf32, #tpu.memory_space<vmem>>, vector<8x256xf32>
    tpu.vector_store %arg1[%c0_1, %c0_2], %1 {strides = array<i32>} : memref<8x256xf32, #tpu.memory_space<vmem>>, vector<8x256xf32>,
    return
  }
}

</mosaic_0001>

<llo_original>
// kernel: tpu_custom_call.1
$region0: #{tpu_custom_call.1}
  #allocation0 [shape = 'u32[]', space=smem, size = 0x4, offset = 0x4, fixed_abs, tag = 'smem constant byte address 0x4 - core index']
  #allocation1 [shape = 'u32[144,128]{1,0:T(1,128)}', space=vmem, size = 0x12000, scoped, tag = 'internal scratch']
  %s0 = inlined_call_operand.hbm [shape: f32[8,256], index: 0, kind: input, shape index: {}]
  %s1 = inlined_call_operand.hbm [shape: f32[8,256], index: 1, kind: output, shape index: {}]
  %s2 = sld [smem:[#allocation0]]
  $region18: #{tpu_custom_call.1} parent=0
    _
  %s4 = ssub.s32 1, %s2
  %s5 = scalar_select 0, %s4, %s2
  $region1: #{tpu_custom_call.1} parent=0
    #allocation2 [shape = 'u8[8192]{0}', space=vmem, size = 0x2000, scoped, tag = 'input window, operand 0, single buffered']
    #allocation3 [shape = 's32[1]{0}', space=sflag, size = 0x4, scoped, tag = 'scoped memory for tpu_custom_call.1']
    #allocation4 [shape = 's32[1]{0}', space=sflag, size = 0x4, scoped, tag = 'scoped memory for tpu_custom_call.1']
    #allocation5 [shape = 'u8[8192]{0}', space=vmem, size = 0x2000, scoped, tag = 'output window, operand 0, single buffered']
    %6 = vsyncpa [#allocation3], 0
    %7 = vsyncpa [#allocation4], 0
    // Predicated region
    $region2: #{tpu_custom_call.1} parent=1 // pred_check
      _
    $region3: #{tpu_custom_call.1} parent=1 // pred_check_branch
      %9 = sbr.rel (0) target = $region5
    $region4: #{tpu_custom_call.1} parent=1 // pred_region
      %s11 = ssub.s32 256, 256
      %12 = vsyncadd [#allocation3], %s11
      %s14 = sshll.u32 [#allocation2], 4
      %s15 = int_to_ptr.vmem [resolvable:$true] %s14
      %17 = dma.hbm_to_vmem [thread:$0]  %s0, 256, %s15, [#allocation3]
    $region5: #{tpu_custom_call.1} parent=1 // pred_fallthru
      _
    // Predicated region
    $region6: #{tpu_custom_call.1} parent=1 // pred_check
      _
    $region7: #{tpu_custom_call.1} parent=1 // pred_check_branch
      %19 = sbr.rel (0) target = $region9
    $region8: #{tpu_custom_call.1} parent=1 // pred_region
      %20 = dma.done [#allocation3], 256
    $region9: #{tpu_custom_call.1} parent=1 // pred_fallthru
      _
    %v21 = vld [vmem:[#allocation2] sm:$0xff]
    %v22 = vld [vmem:[#allocation2 + $0x8] sm:$0xff]
    %23 = vrot.lane.b32.xlu0 %v21, 1
    %v24 = vpop.permute.xlu0 %23
    %25 = vrot.lane.b32.xlu0 %v22, 1
    %v26 = vpop.permute.xlu0 %25
    %v27 = vlaneseq
    %v28 = vand.u32 %v27, 127
    %vm29 = vcmp.lt.s32.totalorder %v28, 1
    %v30 = vsel %vm29, %v24, %v26
    %v31 = vsel %vm29, %v26, %v24
    %32 = vst [vmem:[#allocation5] sm:$0xff] %v31
    %33 = vst [vmem:[#allocation5 + $0x8] sm:$0xff] %v30
    // Predicated region
    $region10: #{tpu_custom_call.1} parent=1 // pred_check
      _
    $region11: #{tpu_custom_call.1} parent=1 // pred_check_branch
      %35 = sbr.rel (0) target = $region13
    $region12: #{tpu_custom_call.1} parent=1 // pred_region
      %s37 = ssub.s32 256, 256
      %38 = vsyncadd [#allocation4], %s37
      %s40 = sshll.u32 [#allocation5], 4
      %s41 = int_to_ptr.vmem [resolvable:$true] %s40
      %43 = dma.vmem_to_hbm [thread:$0]  %s41, 256, %s1, [#allocation4]
    $region13: #{tpu_custom_call.1} parent=1 // pred_fallthru
      _
    // Predicated region
    $region14: #{tpu_custom_call.1} parent=1 // pred_check
      _
    $region15: #{tpu_custom_call.1} parent=1 // pred_check_branch
      %45 = sbr.rel (0) target = $region17
    $region16: #{tpu_custom_call.1} parent=1 // pred_region
      %46 = dma.done [#allocation4], 256
    $region17: #{tpu_custom_call.1} parent=1 // pred_fallthru
      _
    %47 = vsyncpa [#allocation3], 1
    %48 = vsyncpa [#allocation4], 1

</llo_original>
